<compile_context>
chip_gen: v7x
topology: tpu7x:2x2x1
jax: 0.10.0
libtpu: 0.0.40
codegen_flags: <defaults>
</compile_context>

<pallas_src>
import functools

import jax
import jax.numpy as jnp
from jax.experimental import pallas as pl
from jax.experimental.pallas import tpu as pltpu


def _round_up(a: int, b: int) -> int:
    return (a + b - 1) // b * b


def _patch_embed_kernel(x_ref, w_ref, b_ref, o_ref):
    # x_ref: (tm, K) patch rows (compute dtype); w_ref: (K, E_pad) resident weight;
    # b_ref: (1, E_pad) f32 bias; o_ref: (tm, E_pad) output.
    # One MXU matmul per grid step, f32 accumulation, f32 bias add, cast on store.
    acc = jnp.dot(x_ref[...], w_ref[...], preferred_element_type=jnp.float32)
    o_ref[...] = (acc + b_ref[...]).astype(o_ref.dtype)


def _pick_tm(M, K, E_pad, cbytes, obytes, tm=None, vmem_budget=32 << 20):
    """Choose the M-tile size.

    Targets ~1024 rows (fewer, larger grid steps to amortize the ~0.35us/step overhead),
    bounded by a VMEM budget (x and out double-buffered, weight resident), and prefers a
    divisor of M so no padded rows / post-kernel slice are needed.
    """
    if tm is not None:
        return tm
    per_row = 2 * K * cbytes + 2 * E_pad * obytes          # x + out double buffers
    fixed = 2 * K * E_pad * cbytes + 2 * E_pad * 4         # resident weight + bias
    cap = max(64, (vmem_budget - fixed) // per_row)
    target = max(8, (min(1024, int(cap)) // 8) * 8)
    if M <= target:
        return _round_up(M, 8)
    for cand in range(target, 127, -8):                     # prefer tm | M (no padding)
        if M % cand == 0:
            return cand
    return target


def prepare_patch_embed_params(weight, bias, *, compute_dtype=jnp.bfloat16):
    """Once-per-model weight/bias transform (hoisted out of the hot path).

    weight: (E, C, p, p) Conv2d weight; bias: (E,).
    Returns:
      w_mat: (K, E_pad) in compute_dtype, K = C*p*p, feature order (c, kh, kw)
      b_row: (1, E_pad) float32
    E is padded to a multiple of 128 only when necessary (E_pad == E for 768, 1024, ...).
    """
    E, C, ph, pw = weight.shape
    K = C * ph * pw
    E_pad = E if E % 128 == 0 else _round_up(E, 128)
    w_mat = weight.reshape(E, K).T.astype(compute_dtype)     # (K, E)
    b_row = bias.reshape(1, E).astype(jnp.float32)
    if E_pad != E:
        w_mat = jnp.pad(w_mat, ((0, 0), (0, E_pad - E)))
        b_row = jnp.pad(b_row, ((0, 0), (0, E_pad - E)))
    return w_mat, b_row


def patch_embed2_apply(x, w_mat, b_row, patch_size, embed_dim, *,
                       tm=None, compute_dtype=jnp.bfloat16, out_dtype=None):
    """Forward pass given pre-transformed params.  x: (B, C, H, W) NCHW.

    Returns (B, num_patches, embed_dim), matching proj(x).flatten(2).transpose(1, 2)
    (norm_layer=None -> Identity).  Set out_dtype=jnp.bfloat16 to halve output HBM
    traffic when the downstream block consumes bf16.
    """
    B, C, H, W = x.shape
    p = patch_size
    assert H % p == 0 and W % p == 0
    gh, gw = H // p, W // p
    N = gh * gw
    K = C * p * p
    M = B * N
    E = embed_dim
    E_pad = w_mat.shape[1]
    assert w_mat.shape[0] == K, (w_mat.shape, K)

    out_dtype = x.dtype if out_dtype is None else out_dtype
    cbytes = jnp.dtype(compute_dtype).itemsize
    obytes = jnp.dtype(out_dtype).itemsize

    tm = _pick_tm(M, K, E_pad, cbytes, obytes, tm)
    M_pad = _round_up(M, tm)

    # Patchify: pure layout (reshape/transpose/cast, no compute).  The (c, kh, kw)
    # feature order matches the flattened Conv2d weight.  Cast to compute_dtype inside
    # the same fusion so any materialized intermediate is half-width.
    xp = x.reshape(B, C, gh, p, gw, p)
    xp = jnp.transpose(xp, (0, 2, 4, 1, 3, 5))
    xp = xp.reshape(M, K).astype(compute_dtype)
    if M_pad != M:
        xp = jnp.pad(xp, ((0, M_pad - M), (0, 0)))

    grid = (M_pad // tm,)

    # Explicit VMEM budget: x/out double-buffered, weight + bias resident (x2 buffers).
    vmem_needed = (2 * tm * K * cbytes + 2 * K * E_pad * cbytes
                   + 2 * E_pad * 4 + 2 * tm * E_pad * obytes)
    vmem_limit = min(max(int(1.25 * vmem_needed) + (4 << 20), 16 << 20), 48 << 20)

    out = pl.pallas_call(
        _patch_embed_kernel,
        out_shape=jax.ShapeDtypeStruct((M_pad, E_pad), out_dtype),
        grid=grid,
        in_specs=[
            pl.BlockSpec((tm, K), lambda i: (i, 0)),       # patch rows (streamed)
            pl.BlockSpec((K, E_pad), lambda i: (0, 0)),    # weight: fetched once, resident
            pl.BlockSpec((1, E_pad), lambda i: (0, 0)),    # bias: fetched once, resident
        ],
        out_specs=pl.BlockSpec((tm, E_pad), lambda i: (i, 0)),
        compiler_params=pltpu.CompilerParams(
            dimension_semantics=("parallel",),             # megacore-shardable on v7x
            allow_input_fusion=[True, False, False],
            vmem_limit_bytes=vmem_limit,
        ),
        cost_estimate=pl.CostEstimate(
            flops=2 * M_pad * K * E_pad,
            transcendentals=0,
            bytes_accessed=int(M_pad * K * cbytes + K * E_pad * cbytes
                               + E_pad * 4 + M_pad * E_pad * obytes)),
    )(xp, w_mat, b_row)

    if M_pad != M or E_pad != E:
        out = out[:M, :E]          # avoided entirely when tm | M and E % 128 == 0
    return out.reshape(B, N, E)


def patch_embed2(x, weight, bias, patch_size, *, tm=None,
                 compute_dtype=jnp.bfloat16, out_dtype=None):
    """Convenience one-shot forward (norm_layer=None -> Identity)."""
    w_mat, b_row = prepare_patch_embed_params(weight, bias, compute_dtype=compute_dtype)
    return patch_embed2_apply(x, w_mat, b_row, patch_size, weight.shape[0],
                              tm=tm, compute_dtype=compute_dtype, out_dtype=out_dtype)


if __name__ == "__main__":
    # Small shapes consistent with the module: img_size=16, patch=4,
    # in_channel=4, embed_dim=32, batch=2  ->  num_patches = 16, K = 64.
    B, C, H, W = 2, 4, 16, 16
    p = 4
    E = 32

    key = jax.random.PRNGKey(0)
    kx, kw, kb = jax.random.split(key, 3)
    x = jax.random.normal(kx, (B, C, H, W), dtype=jnp.float32)
    weight = jax.random.normal(kw, (E, C, p, p), dtype=jnp.float32) * 0.02
    bias = jax.random.normal(kb, (E,), dtype=jnp.float32) * 0.02

    # Parameter prep hoisted out of the hot path; hot path is jitted.
    w_mat, b_row = prepare_patch_embed_params(weight, bias)
    fwd = jax.jit(functools.partial(patch_embed2_apply, patch_size=p, embed_dim=E))

    out = fwd(x, w_mat, b_row)
    out = jax.block_until_ready(out)
    assert out.shape == (B, (H // p) * (W // p), E), out.shape

    # Reference: conv-as-matmul in f32.  Kernel uses bf16 matmul inputs with f32
    # accumulation, so compare with a relaxed tolerance.
    ref = (
        jnp.einsum(
            "bnck,eck->bne",
            x.reshape(B, C, H // p, p, W // p, p)
            .transpose(0, 2, 4, 1, 3, 5)
            .reshape(B, (H // p) * (W // p), C, p * p),
            weight.reshape(E, C, p * p),
        )
        + bias
    )
    assert jnp.allclose(out, ref, atol=1e-2, rtol=1e-2), float(
        jnp.max(jnp.abs(out - ref)))

    print("KERNEL_OK")
</pallas_src>

<mosaic_0001>
module attributes {stable_mosaic.version = 11 : i64} {
  func.func @_patch_embed_kernel(%arg0: i32, %arg1: memref<32x64xbf16, #tpu.memory_space<vmem>>, %arg2: memref<64x128xbf16, #tpu.memory_space<vmem>>, %arg3: memref<1x128xf32, #tpu.memory_space<vmem>>, %arg4: memref<32x128xf32, #tpu.memory_space<vmem>>) attributes {dimension_semantics = [#tpu.dimension_semantics<parallel>], iteration_bounds = array<i64: 1>, scalar_prefetch = 0 : i64, scratch_operands = 0 : i64, tpu.core_type = #tpu.core_type<tc>, window_params = [{transform_indices = @transform_0, window_bounds = array<i64: 32, 64>}, {pipeline_mode = #tpu.pipeline_mode<synchronous>, transform_indices = @transform_1, window_bounds = array<i64: 64, 128>}, {pipeline_mode = #tpu.pipeline_mode<synchronous>, transform_indices = @transform_2, window_bounds = array<i64: 1, 128>}, {transform_indices = @transform_3, window_bounds = array<i64: 32, 128>}]} {
    %c0 = arith.constant 0 : index
    %c0_0 = arith.constant 0 : index
    %0 = vector.load %arg1[%c0, %c0_0] : memref<32x64xbf16, #tpu.memory_space<vmem>>, vector<32x64xbf16>
    %c0_1 = arith.constant 0 : index
    %c0_2 = arith.constant 0 : index
    %1 = vector.load %arg2[%c0_1, %c0_2] : memref<64x128xbf16, #tpu.memory_space<vmem>>, vector<64x128xbf16>
    %cst = arith.constant dense<0.000000e+00> : vector<32x128xf32>
    %2 = tpu.matmul %0, %1, %cst {dimension_numbers = #tpu.dot_dimension_numbers<[1], [0], [0], [1], [0, 0, 1, 1], [], []>} : vector<32x64xbf16>, vector<64x128xbf16>, vector<32x128xf32> -> vector<32x128xf32>
    %c0_3 = arith.constant 0 : index
    %c0_4 = arith.constant 0 : index
    %3 = vector.load %arg3[%c0_3, %c0_4] : memref<1x128xf32, #tpu.memory_space<vmem>>, vector<1x128xf32>
    %4 = vector.broadcast %3 : vector<1x128xf32> to vector<32x128xf32>
    %5 = arith.addf %2, %4 : vector<32x128xf32>
    %c0_5 = arith.constant 0 : index
    %c0_6 = arith.constant 0 : index
    %6 = vector.load %arg4[%c0_5, %c0_6] : memref<32x128xf32, #tpu.memory_space<vmem>>, vector<32x128xf32>
    tpu.vector_store %arg4[%c0_5, %c0_6], %5 {strides = array<i32>} : memref<32x128xf32, #tpu.memory_space<vmem>>, vector<32x128xf32>,
    return
  }
  func.func @transform_0(%arg0: i32) -> (i32, i32) {
    %c0_i32 = arith.constant 0 : i32
    %c0_i32_0 = arith.constant 0 : i32
    return %arg0, %c0_i32 : i32, i32
  }
  func.func @transform_1(%arg0: i32) -> (i32, i32) {
    %c0_i32 = arith.constant 0 : i32
    %c0_i32_0 = arith.constant 0 : i32
    %c0_i32_1 = arith.constant 0 : i32
    return %c0_i32, %c0_i32_0 : i32, i32
  }
  func.func @transform_2(%arg0: i32) -> (i32, i32) {
    %c0_i32 = arith.constant 0 : i32
    %c0_i32_0 = arith.constant 0 : i32
    %c0_i32_1 = arith.constant 0 : i32
    return %c0_i32, %c0_i32_0 : i32, i32
  }
  func.func @transform_3(%arg0: i32) -> (i32, i32) {
    %c0_i32 = arith.constant 0 : i32
    %c0_i32_0 = arith.constant 0 : i32
    return %arg0, %c0_i32 : i32, i32
  }
}

</mosaic_0001>

<llo_original>
// kernel: patch_embed2_apply.1
$region0: #{patch_embed2_apply.1}
  #allocation0 [shape = 'u32[]', space=smem, size = 0x4, offset = 0x4, fixed_abs, tag = 'smem constant byte address 0x4 - core index']
  #allocation1 [shape = 'u32[144,128]{1,0:T(1,128)}', space=vmem, size = 0x12000, scoped, tag = 'internal scratch']
  %s0 = inlined_call_operand.vmem [shape: bf16[32,64], index: 0, kind: input, shape index: {}]
  %s1 = inlined_call_operand.vmem [shape: bf16[64,128], index: 1, kind: input, shape index: {}]
  %s2 = inlined_call_operand.vmem [shape: f32[1,128], index: 2, kind: input, shape index: {}]
  %s3 = inlined_call_operand.hbm [shape: f32[32,128], index: 3, kind: output, shape index: {}]
  %s4 = sld [smem:[#allocation0]]
  $region22: #{patch_embed2_apply.1} parent=0
    _
  %s6 = ssub.s32 1, %s4
  %s7 = scalar_select 0, %s6, %s4
  $region1: #{patch_embed2_apply.1} parent=0
    #allocation2 [shape = 'u8[16384]{0}', space=vmem, size = 0x4000, scoped, tag = 'output window, operand 0, single buffered']
    #allocation3 [shape = 's32[1]{0}', space=sflag, size = 0x4, scoped, tag = 'scoped memory for patch_embed2_apply.1']
    %8 = vsyncpa [#allocation3], 0
    // Predicated region
    $region2: #{patch_embed2_apply.1} parent=1 // pred_check
      _
    $region3: #{patch_embed2_apply.1} parent=1 // pred_check_branch
      %10 = sbr.rel (0) target = $region5
    $region4: #{patch_embed2_apply.1} parent=1 // pred_region
      _
    $region5: #{patch_embed2_apply.1} parent=1 // pred_fallthru
      _
    // Predicated region
    $region6: #{patch_embed2_apply.1} parent=1 // pred_check
      _
    $region7: #{patch_embed2_apply.1} parent=1 // pred_check_branch
      %12 = sbr.rel (0) target = $region9
    $region8: #{patch_embed2_apply.1} parent=1 // pred_region
      _
    $region9: #{patch_embed2_apply.1} parent=1 // pred_fallthru
      _
    // Predicated region
    $region10: #{patch_embed2_apply.1} parent=1 // pred_check
      _
    $region11: #{patch_embed2_apply.1} parent=1 // pred_check_branch
      %14 = sbr.rel (0) target = $region13
    $region12: #{patch_embed2_apply.1} parent=1 // pred_region
      _
    $region13: #{patch_embed2_apply.1} parent=1 // pred_fallthru
      _
    %v16 = vld [vmem:[%s0] sm:$0xf]
    %v17 = vld [vmem:[%s0 + $0x4] sm:$0xf]
    %v18 = vld [vmem:[%s0 + $0x8] sm:$0xf]
    %v19 = vld [vmem:[%s0 + $0xc] sm:$0xf]
    %v20 = vld [vmem:[%s1] sm:$0xf]
    %v21 = vld [vmem:[%s1 + $0x4] sm:$0xf]
    %v22 = vld [vmem:[%s1 + $0x8] sm:$0xf]
    %v23 = vld [vmem:[%s1 + $0xc] sm:$0xf]
    %v24 = vld [vmem:[%s1 + $0x10] sm:$0xf]
    %v25 = vld [vmem:[%s1 + $0x14] sm:$0xf]
    %v26 = vld [vmem:[%s1 + $0x18] sm:$0xf]
    %v27 = vld [vmem:[%s1 + $0x1c] sm:$0xf]
    %v28 = vld [vmem:[%s2] sm:$0x1]
    %v30 = vlaneseq
    %v31 = vshrl.u32 %v30, 7
    %v32 = vsub.s32 0, %v31
    %v33 = vrot.slane %v28, %v32
    %v39 = vunpack.c.l.b16 %v16
    %v40 = vunpack.c.l.b16 %v17
    %v41 = vunpack.c.l.b16 %v18
    %v42 = vunpack.c.l.b16 %v19
    %v43 = vpack.c.b16 %v40, %v39
    %v44 = vpack.c.b16 %v42, %v41
    %v53 = vunpack.c.l.b16 %v20
    %v54 = vunpack.c.l.b16 %v21
    %v55 = vunpack.c.l.b16 %v22
    %v56 = vunpack.c.l.b16 %v23
    %v57 = vunpack.c.l.b16 %v24
    %v58 = vunpack.c.l.b16 %v25
    %v59 = vunpack.c.l.b16 %v26
    %v60 = vunpack.c.l.b16 %v27
    %v61 = vpack.c.b16 %v54, %v53
    %v62 = vpack.c.b16 %v56, %v55
    %v63 = vpack.c.b16 %v58, %v57
    %v64 = vpack.c.b16 %v60, %v59
    %vm69 = vcmask 523264
    %v71 = vsel %vm69, %v43, 0
    %v74 = vsel %vm69, %v44, 0
    %76 = vmatprep.subr.bf16.mxu0 0
    %77 = vmatpush1.bf16.msra.mxu0 %v61
    %78 = vmatprep.subr.bf16.mxu0 0
    %79 = vmatpush1.bf16.msra.mxu0 %v62
    %80 = vmatprep.subr.bf16.mxu0 0
    %81 = vmatpush1.bf16.msra.mxu0 %v63
    %82 = vmatprep.subr.bf16.mxu0 0
    %83 = vmatpush1.bf16.msra.mxu0 %v64
    %84 = vmatprep.subr.bf16.mxu0 0
    %85 = vmatpush1.bf16.msra.mxu0 0
    %86 = vmatprep.subr.bf16.mxu0 0
    %87 = vmatpush1.bf16.msra.mxu0 0
    %88 = vmatprep.subr.bf16.mxu0 0
    %89 = vmatpush1.bf16.msra.mxu0 0
    %90 = vmatprep.subr.bf16.mxu0 0
    %91 = vmatpush1.bf16.msra.mxu0 0
    %92 = vmatprep.subr.bf16.mxu0 0
    %93 = vmatpush1.bf16.msra.mxu0 0
    %94 = vmatprep.subr.bf16.mxu0 0
    %95 = vmatpush1.bf16.msra.mxu0 0
    %96 = vmatprep.subr.bf16.mxu0 0
    %97 = vmatpush1.bf16.msra.mxu0 0
    %98 = vmatprep.subr.bf16.mxu0 0
    %99 = vmatpush1.bf16.msra.mxu0 0
    %100 = vmatprep.subr.bf16.mxu0 0
    %101 = vmatpush1.bf16.msra.mxu0 0
    %102 = vmatprep.subr.bf16.mxu0 0
    %103 = vmatpush1.bf16.msra.mxu0 0
    %104 = vmatprep.subr.bf16.mxu0 0
    %105 = vmatpush1.bf16.msra.mxu0 0
    %106 = vmatprep.subr.bf16.mxu0 0
    %107 = vmatpush1.bf16.msra.mxu0 0
    %108 = vmatprep.mubr.bf16.mxu0 0
    %109 = vmatmul.mubr.bf16.gmra.mrb[0].mxu0 %v71
    %v110 = vpop.f32.mrb[0].mxu0
    %v111 = vadd.f32 %v33, %v110
    %v112 = vpop.f32.mrb[0].mxu0
    %v113 = vpop.f32.mrb[0].mxu0
    %v114 = vadd.f32 %v33, %v113
    %v115 = vpop.f32.mrb[0].mxu0
    %116 = vmatprep.mubr.bf16.mxu0 0
    %117 = vmatmul.mubr.bf16.gmra.mrb[0].mxu0 %v74
    %v118 = vpop.f32.mrb[0].mxu0
    %v119 = vadd.f32 %v33, %v118
    %v120 = vpop.f32.mrb[0].mxu0
    %v121 = vpop.f32.mrb[0].mxu0
    %v122 = vadd.f32 %v33, %v121
    %v123 = vpop.f32.mrb[0].mxu0
    %124 = vdwg.mxu0
    %125 = vst [vmem:[#allocation2] sm:$0xff] %v111
    %126 = vst [vmem:[#allocation2 + $0x8] sm:$0xff] %v114
    %127 = vst [vmem:[#allocation2 + $0x10] sm:$0xff] %v119
    %128 = vst [vmem:[#allocation2 + $0x18] sm:$0xff] %v122
    // Predicated region
    $region14: #{patch_embed2_apply.1} parent=1 // pred_check
      _
    $region15: #{patch_embed2_apply.1} parent=1 // pred_check_branch
      %130 = sbr.rel (0) target = $region17
    $region16: #{patch_embed2_apply.1} parent=1 // pred_region
      %s132 = ssub.s32 512, 512
      %133 = vsyncadd [#allocation3], %s132
      %s134 = sshll.u32 [#allocation2], 4
      %s135 = int_to_ptr.vmem [resolvable:$true] %s134
      %140 = dma.vmem_to_hbm [thread:$0]  %s135, 512, %s3, [#allocation3], 128, 128, 8
    $region17: #{patch_embed2_apply.1} parent=1 // pred_fallthru
      _
    // Predicated region
    $region18: #{patch_embed2_apply.1} parent=1 // pred_check
      _
    $region19: #{patch_embed2_apply.1} parent=1 // pred_check_branch
      %142 = sbr.rel (0) target = $region21
    $region20: #{patch_embed2_apply.1} parent=1 // pred_region
      %143 = dma.done [#allocation3], 512
    $region21: #{patch_embed2_apply.1} parent=1 // pred_fallthru
      _
    %144 = vsyncpa [#allocation3], 1

</llo_original>
